<compile_context>
chip_gen: v6e
topology: v6e:2x2x1
jax: 0.10.0
libtpu: 0.0.40
codegen_flags: <defaults>
</compile_context>

<pallas_src>
import jax
import jax.numpy as jnp
from jax.experimental import pallas as pl
from jax.experimental.pallas import tpu as pltpu


def affine_kernel(x_ref, wb_ref, o_ref):
    # wb_ref rows 0..2 = W_eff (3,3); row 3 = b_eff (1,3).
    # K = N = 3: stay on the VPU -- three broadcast multiply-adds finish in a
    # handful of bundles and skip the MXU result-path latency entirely.
    x = x_ref[...]                                    # (B, 3)
    wb = wb_ref[...]                                  # (4, 3)
    y = (x[:, 0:1] * wb[0:1, :]
         + x[:, 1:2] * wb[1:2, :]
         + x[:, 2:3] * wb[2:3, :]
         + wb[3:4, :])
    o_ref[...] = y.astype(o_ref.dtype)


def fold_params(w1, b1, w2, b2, w3, b3):
    """One-time fold of the bias-only Linear chain into a single affine map,
    packed into one (4, 3) slab so the kernel needs exactly one weight DMA."""
    w_eff = w1 @ w2 @ w3                              # (3, 3)
    b_eff = b1 @ w2 @ w3 + b2 @ w3 + b3               # (1, 3)
    return jnp.concatenate([w_eff, b_eff], axis=0)    # (4, 3)


def mlp_forward(x, wb):
    B = x.shape[0]
    out2d = pl.pallas_call(
        affine_kernel,
        out_shape=jax.ShapeDtypeStruct((B, 3), jnp.float32),
        # No grid: single invocation, whole arrays resident in VMEM. Drops the
        # double-buffer / prologue / epilogue machinery that dominated wall
        # time for the previous grid=(1,) version.
        in_specs=[
            pl.BlockSpec(memory_space=pltpu.MemorySpace.VMEM),
            pl.BlockSpec(memory_space=pltpu.MemorySpace.VMEM),
        ],
        out_specs=pl.BlockSpec(memory_space=pltpu.MemorySpace.VMEM),
    )(x, wb)
    # result.view(batch_dim, 1, 3) in the reference module
    return out2d.reshape(B, 1, 3)


def init_params(key):
    # Deterministic synthetic init, PyTorch-style uniform(-1/sqrt(fan_in), ...)
    def linear(key, fan_in, fan_out):
        kw, kb = jax.random.split(key)
        bound = 1.0 / jnp.sqrt(fan_in)
        # Stored transposed: (in_features, out_features)
        w = jax.random.uniform(kw, (fan_in, fan_out), jnp.float32, -bound, bound)
        b = jax.random.uniform(kb, (1, fan_out), jnp.float32, -bound, bound)
        return w, b

    k1, k2, k3 = jax.random.split(key, 3)
    w1, b1 = linear(k1, 3, 75)
    w2, b2 = linear(k2, 75, 75)
    w3, b3 = linear(k3, 75, 3)
    return w1, b1, w2, b2, w3, b3


if __name__ == "__main__":
    key = jax.random.PRNGKey(0)
    kx, kp = jax.random.split(key)

    B = 8  # small batch; feature_dim = 3 is fixed by Linear(3, 75)
    x = jax.random.normal(kx, (B, 3), jnp.float32)
    w1, b1, w2, b2, w3, b3 = init_params(kp)

    # One-time fold at init time (valid because there are no activations).
    wb = jax.block_until_ready(fold_params(w1, b1, w2, b2, w3, b3))

    out = mlp_forward(x, wb)
    out = jax.block_until_ready(out)

    # Reference: the original un-folded 3-layer chain in plain JAX.
    ref = (((x @ w1 + b1) @ w2 + b2) @ w3 + b3).reshape(B, 1, 3)
    assert out.shape == (B, 1, 3)
    assert jnp.allclose(out, ref, atol=1e-4, rtol=1e-4), (
        float(jnp.max(jnp.abs(out - ref))))

    print("KERNEL_OK")
</pallas_src>

<mosaic_0001>
module attributes {stable_mosaic.version = 11 : i64} {
  func.func @affine_kernel(%arg0: memref<8x3xf32, #tpu.memory_space<vmem>>, %arg1: memref<4x3xf32, #tpu.memory_space<vmem>>, %arg2: memref<8x3xf32, #tpu.memory_space<vmem>>) attributes {dimension_semantics = [], scalar_prefetch = 0 : i64, scratch_operands = 0 : i64, tpu.core_type = #tpu.core_type<tc>} {
    %c0 = arith.constant 0 : index
    %c0_0 = arith.constant 0 : index
    %0 = vector.load %arg0[%c0, %c0_0] : memref<8x3xf32, #tpu.memory_space<vmem>>, vector<8x3xf32>
    %c0_1 = arith.constant 0 : index
    %c0_2 = arith.constant 0 : index
    %1 = vector.load %arg1[%c0_1, %c0_2] : memref<4x3xf32, #tpu.memory_space<vmem>>, vector<4x3xf32>
    %2 = vector.extract_strided_slice %0 {offsets = [0, 0], sizes = [8, 1], strides = [1, 1]} : vector<8x3xf32> to vector<8x1xf32>
    %3 = vector.extract_strided_slice %1 {offsets = [0, 0], sizes = [1, 3], strides = [1, 1]} : vector<4x3xf32> to vector<1x3xf32>
    %4 = vector.broadcast %2 : vector<8x1xf32> to vector<8x3xf32>
    %5 = vector.broadcast %3 : vector<1x3xf32> to vector<8x3xf32>
    %6 = arith.mulf %4, %5 : vector<8x3xf32>
    %7 = vector.extract_strided_slice %0 {offsets = [0, 1], sizes = [8, 1], strides = [1, 1]} : vector<8x3xf32> to vector<8x1xf32>
    %8 = vector.extract_strided_slice %1 {offsets = [1, 0], sizes = [1, 3], strides = [1, 1]} : vector<4x3xf32> to vector<1x3xf32>
    %9 = vector.broadcast %7 : vector<8x1xf32> to vector<8x3xf32>
    %10 = vector.broadcast %8 : vector<1x3xf32> to vector<8x3xf32>
    %11 = arith.mulf %9, %10 : vector<8x3xf32>
    %12 = arith.addf %6, %11 : vector<8x3xf32>
    %13 = vector.extract_strided_slice %0 {offsets = [0, 2], sizes = [8, 1], strides = [1, 1]} : vector<8x3xf32> to vector<8x1xf32>
    %14 = vector.extract_strided_slice %1 {offsets = [2, 0], sizes = [1, 3], strides = [1, 1]} : vector<4x3xf32> to vector<1x3xf32>
    %15 = vector.broadcast %13 : vector<8x1xf32> to vector<8x3xf32>
    %16 = vector.broadcast %14 : vector<1x3xf32> to vector<8x3xf32>
    %17 = arith.mulf %15, %16 : vector<8x3xf32>
    %18 = arith.addf %12, %17 : vector<8x3xf32>
    %19 = vector.extract_strided_slice %1 {offsets = [3, 0], sizes = [1, 3], strides = [1, 1]} : vector<4x3xf32> to vector<1x3xf32>
    %20 = vector.broadcast %19 : vector<1x3xf32> to vector<8x3xf32>
    %21 = arith.addf %18, %20 : vector<8x3xf32>
    %c0_3 = arith.constant 0 : index
    %c0_4 = arith.constant 0 : index
    %22 = vector.load %arg2[%c0_3, %c0_4] : memref<8x3xf32, #tpu.memory_space<vmem>>, vector<8x3xf32>
    tpu.vector_store %arg2[%c0_3, %c0_4], %21 {strides = array<i32>} : memref<8x3xf32, #tpu.memory_space<vmem>>, vector<8x3xf32>,
    return
  }
}

</mosaic_0001>

<llo_original>
// kernel: tpu_custom_call.1
$region0: #{tpu_custom_call.1}
  #allocation0 [shape = 'u32[]', space=smem, size = 0x4, offset = 0x4, fixed_abs, tag = 'smem constant byte address 0x4 - core index']
  #allocation1 [shape = 'u32[144,128]{1,0:T(1,128)}', space=vmem, size = 0x12000, scoped, tag = 'internal scratch']
  %s0 = inlined_call_operand.vmem [shape: f32[8,3], index: 0, kind: input, shape index: {}]
  %s1 = inlined_call_operand.vmem [shape: f32[4,3], index: 1, kind: input, shape index: {}]
  %s2 = inlined_call_operand.vmem [shape: f32[8,3], index: 2, kind: output, shape index: {}]
  %s3 = sld [smem:[#allocation0]]
  $region18: #{tpu_custom_call.1} parent=0
    _
  %s5 = ssub.s32 1, %s3
  %s6 = scalar_select 0, %s5, %s3
  // Predicated region
  $region2: #{tpu_custom_call.1} parent=0 // pred_check
    _
  $region3: #{tpu_custom_call.1} parent=0 // pred_check_branch
    %8 = sbr.rel (0) target = $region5
  $region4: #{tpu_custom_call.1} parent=0 // pred_region
    _
  $region5: #{tpu_custom_call.1} parent=0 // pred_fallthru
    _
  // Predicated region
  $region6: #{tpu_custom_call.1} parent=0 // pred_check
    _
  $region7: #{tpu_custom_call.1} parent=0 // pred_check_branch
    %10 = sbr.rel (0) target = $region9
  $region8: #{tpu_custom_call.1} parent=0 // pred_region
    _
  $region9: #{tpu_custom_call.1} parent=0 // pred_fallthru
    _
  %v11 = vld [vmem:[%s0] sm:$0xff]
  %v12 = vld [vmem:[%s1] sm:$0xf]
  %14 = vset.pattern.permute.xlu0 0
  %15 = vperm.xlu0 %14, %v11
  %v16 = vpop.permute.xlu0 %15
  %v18 = vlaneseq
  %v19 = vshrl.u32 %v18, 7
  %v20 = vsub.s32 0, %v19
  %v21 = vrot.slane %v12, %v20
  %v22 = vmul.f32 %v16, %v21
  %23 = vset.pattern.permute.xlu0 1
  %24 = vperm.xlu0 %23, %v11
  %v25 = vpop.permute.xlu0 %24
  %v27 = vlaneseq
  %v28 = vshrl.u32 %v27, 7
  %v29 = vsub.s32 1, %v28
  %v30 = vrot.slane %v12, %v29
  %v31 = vmul.f32 %v25, %v30
  %v32 = vadd.f32 %v22, %v31
  %33 = vset.pattern.permute.xlu0 2
  %34 = vperm.xlu0 %33, %v11
  %v35 = vpop.permute.xlu0 %34
  %v37 = vlaneseq
  %v38 = vshrl.u32 %v37, 7
  %v39 = vsub.s32 2, %v38
  %v40 = vrot.slane %v12, %v39
  %v41 = vmul.f32 %v35, %v40
  %v42 = vadd.f32 %v32, %v41
  %v43 = vlaneseq
  %v44 = vshrl.u32 %v43, 7
  %v45 = vsub.s32 3, %v44
  %v46 = vrot.slane %v12, %v45
  %v47 = vadd.f32 %v42, %v46
  %vm48 = vcmask 23552
  %49 = vst.msk [vmem:[%s2] sm:$0xff] %vm48, %v47
  // Predicated region
  $region10: #{tpu_custom_call.1} parent=0 // pred_check
    _
  $region11: #{tpu_custom_call.1} parent=0 // pred_check_branch
    %51 = sbr.rel (0) target = $region13
  $region12: #{tpu_custom_call.1} parent=0 // pred_region
    _
  $region13: #{tpu_custom_call.1} parent=0 // pred_fallthru
    _
  // Predicated region
  $region14: #{tpu_custom_call.1} parent=0 // pred_check
    _
  $region15: #{tpu_custom_call.1} parent=0 // pred_check_branch
    %53 = sbr.rel (0) target = $region17
  $region16: #{tpu_custom_call.1} parent=0 // pred_region
    _
  $region17: #{tpu_custom_call.1} parent=0 // pred_fallthru
    _

</llo_original>
